<compile_context>
chip_gen: v7x
topology: tpu7x:2x2x1
jax: 0.10.0
libtpu: 0.0.40
codegen_flags: <defaults>
</compile_context>

<pallas_src>
import functools

import jax
import jax.numpy as jnp
from jax.experimental import pallas as pl
from jax.experimental.pallas import tpu as pltpu

# "-inf" substitute: avoids inf-inf -> NaN in the running-max update.  Masked
# lanes contribute exp(_NEG_LARGE - m_new) == 0 for any realistic data; only a
# genuine value at ~-3.4e38 could leak exp(0)=1 into the sum (non-issue).
_NEG_LARGE = float(jnp.finfo(jnp.float32).min)


def _detect_budgets():
    """Generation-aware VMEM budgets.

    v5e/v6e have 128 MiB physical VMEM per TensorCore; v7x only 64 MiB.  The
    scoped limit, the per-grid-step tile target (amortizes ~0.35us/step) and
    the single-pass block ceiling (accounts for 2x(in)+2x(out) double buffers
    plus f32 temporaries, ~6x the tile) scale with the reported capacity.
    """
    vmem_phys = 64 << 20  # conservative default (v7x per-TC)
    try:
        info = pltpu.get_tpu_info()
        vmem_phys = int(getattr(info, "vmem_capacity_bytes", vmem_phys))
    except Exception:
        pass
    if vmem_phys >= (96 << 20):          # v5e / v6e class (128 MiB VMEM)
        return {
            "vmem_limit": 64 << 20,
            "work_budget": 6 << 20,      # per-grid-step tile target (HBM bytes)
            "single_pass_max": 8 << 20,  # max f32 block for single-pass path
        }
    return {                             # v7x class (64 MiB VMEM per TC)
        "vmem_limit": 32 << 20,
        "work_budget": 3 << 20,
        "single_pass_max": 4 << 20,
    }


_BUDGETS = _detect_budgets()


def _compiler_params(semantics):
    return pltpu.CompilerParams(
        dimension_semantics=semantics,
        vmem_limit_bytes=_BUDGETS["vmem_limit"],
    )


def _round_down_mult(v, m):
    return max(m, (v // m) * m)


def _sublane_multiple(dtype):
    # Sub-32-bit dtypes pack along sublanes: f32 -> 8, bf16/f16 -> 16, int8/fp8 -> 32.
    return max(8, 32 // max(1, jnp.dtype(dtype).itemsize))


def _use_approx_recip(dtype):
    # EUP vrcp (approx) is essentially free; keep exact reciprocal for strict-f32
    # consumers so the 1e-5 tolerance holds.
    return jnp.dtype(dtype) != jnp.float32


# --------------------------------------------------------------------------
# Kernels
# --------------------------------------------------------------------------
def _softmax_rows_kernel(x_ref, o_ref, *, approx_recip):
    """Numerically-stable softmax over the last axis of a (tile_r, N) block."""
    x = x_ref[...].astype(jnp.float32)
    m = jnp.max(x, axis=-1, keepdims=True)
    e = jnp.exp(x - m)
    s = jnp.sum(e, axis=-1, keepdims=True)
    o_ref[...] = (e * pl.reciprocal(s, approx=approx_recip)).astype(o_ref.dtype)


def _softmax_channels_kernel(x_ref, o_ref, *, approx_recip):
    """Softmax over axis=1 (channels, sublanes) of a (tile_b, C, tile_hw) block."""
    x = x_ref[...].astype(jnp.float32)
    m = jnp.max(x, axis=1, keepdims=True)
    e = jnp.exp(x - m)
    s = jnp.sum(e, axis=1, keepdims=True)
    o_ref[...] = (e * pl.reciprocal(s, approx=approx_recip)).astype(o_ref.dtype)


def _softmax_rows_stats_kernel(x_ref, m_ref, s_ref, *, tile_n, n_total, needs_mask):
    """Pass 1 of the long-row softmax: running max / running sum over N tiles."""
    k = pl.program_id(1)

    @pl.when(k == 0)
    def _():
        m_ref[...] = jnp.full(m_ref.shape, _NEG_LARGE, m_ref.dtype)
        s_ref[...] = jnp.zeros_like(s_ref)

    x = x_ref[...].astype(jnp.float32)
    if needs_mask:
        col = jax.lax.broadcasted_iota(jnp.int32, x.shape, 1) + k * tile_n
        x = jnp.where(col < n_total, x, _NEG_LARGE)

    m_prev = m_ref[...]
    m_new = jnp.maximum(m_prev, jnp.max(x, axis=-1, keepdims=True))
    s_ref[...] = (s_ref[...] * jnp.exp(m_prev - m_new)
                  + jnp.sum(jnp.exp(x - m_new), axis=-1, keepdims=True))
    m_ref[...] = m_new


def _softmax_rows_normalize_kernel(x_ref, m_ref, s_ref, o_ref, *, approx_recip):
    """Pass 2 of the long-row softmax: exp(x - m) * (1 / s) with per-row m, s."""
    x = x_ref[...].astype(jnp.float32)
    e = jnp.exp(x - m_ref[...])
    o_ref[...] = (e * pl.reciprocal(s_ref[...], approx=approx_recip)).astype(o_ref.dtype)


def _softmax_channels_stats_kernel(x_ref, m_ref, s_ref, *, tile_c, c_total, needs_mask):
    """Pass 1 of the large-C softmax: running max / running sum over C tiles."""
    k = pl.program_id(2)

    @pl.when(k == 0)
    def _():
        m_ref[...] = jnp.full(m_ref.shape, _NEG_LARGE, m_ref.dtype)
        s_ref[...] = jnp.zeros_like(s_ref)

    x = x_ref[...].astype(jnp.float32)
    if needs_mask:
        ch = jax.lax.broadcasted_iota(jnp.int32, x.shape, 1) + k * tile_c
        x = jnp.where(ch < c_total, x, _NEG_LARGE)

    m_prev = m_ref[...]
    m_new = jnp.maximum(m_prev, jnp.max(x, axis=1, keepdims=True))
    s_ref[...] = (s_ref[...] * jnp.exp(m_prev - m_new)
                  + jnp.sum(jnp.exp(x - m_new), axis=1, keepdims=True))
    m_ref[...] = m_new


def _softmax_channels_normalize_kernel(x_ref, m_ref, s_ref, o_ref, *, approx_recip):
    x = x_ref[...].astype(jnp.float32)
    e = jnp.exp(x - m_ref[...])
    o_ref[...] = (e * pl.reciprocal(s_ref[...], approx=approx_recip)).astype(o_ref.dtype)


# --------------------------------------------------------------------------
# Wrappers (tile sizing + pallas_call plumbing)
# --------------------------------------------------------------------------
def _softmax_rows_single(x2d, tile_r, approx_recip):
    R, N = x2d.shape
    kernel = functools.partial(_softmax_rows_kernel, approx_recip=approx_recip)
    # TODO(synk): optionally alias input->output (input_output_aliases) when the
    # caller donates x, to drop the second full-size HBM activation buffer.
    return pl.pallas_call(
        kernel,
        out_shape=jax.ShapeDtypeStruct((R, N), x2d.dtype),
        grid_spec=pl.GridSpec(
            grid=(pl.cdiv(R, tile_r),),
            in_specs=[pl.BlockSpec((tile_r, N), lambda i: (i, 0))],
            out_specs=pl.BlockSpec((tile_r, N), lambda i: (i, 0)),
        ),
        compiler_params=_compiler_params(("parallel",)),
    )(x2d)


def _softmax_rows_two_pass(x2d, tile_r, tile_n, approx_recip):
    """Softmax for rows too long to hold in VMEM: tile the reduce axis."""
    R, N = x2d.shape
    nr = pl.cdiv(R, tile_r)
    nk = pl.cdiv(N, tile_n)
    needs_mask = (N % tile_n) != 0

    stats_kernel = functools.partial(
        _softmax_rows_stats_kernel, tile_n=tile_n, n_total=N, needs_mask=needs_mask)

    # Pass 1: per-row max and sum(exp) accumulated across reduce tiles.
    m, s = pl.pallas_call(
        stats_kernel,
        out_shape=(jax.ShapeDtypeStruct((R, 1), jnp.float32),
                   jax.ShapeDtypeStruct((R, 1), jnp.float32)),
        grid_spec=pl.GridSpec(
            grid=(nr, nk),
            in_specs=[pl.BlockSpec((tile_r, tile_n), lambda i, k: (i, k))],
            out_specs=(pl.BlockSpec((tile_r, 1), lambda i, k: (i, 0)),
                       pl.BlockSpec((tile_r, 1), lambda i, k: (i, 0))),
        ),
        compiler_params=_compiler_params(("parallel", "arbitrary")),
    )(x2d)

    norm_kernel = functools.partial(
        _softmax_rows_normalize_kernel, approx_recip=approx_recip)

    # Pass 2: normalize each reduce tile independently (fully parallel).
    return pl.pallas_call(
        norm_kernel,
        out_shape=jax.ShapeDtypeStruct((R, N), x2d.dtype),
        grid_spec=pl.GridSpec(
            grid=(nr, nk),
            in_specs=[pl.BlockSpec((tile_r, tile_n), lambda i, k: (i, k)),
                      pl.BlockSpec((tile_r, 1), lambda i, k: (i, 0)),
                      pl.BlockSpec((tile_r, 1), lambda i, k: (i, 0))],
            out_specs=pl.BlockSpec((tile_r, tile_n), lambda i, k: (i, k)),
        ),
        compiler_params=_compiler_params(("parallel", "parallel")),
    )(x2d, m, s)


def softmax_rows(x2d):
    """Softmax over the last axis of a 2-D (R, N) array."""
    R, N = x2d.shape
    itemsize = jnp.dtype(x2d.dtype).itemsize
    sub = _sublane_multiple(x2d.dtype)
    row_bytes_hbm = N * itemsize          # HBM traffic per row (dtype-aware)
    row_bytes_f32 = N * 4                 # in-kernel f32 temporaries per row
    approx_recip = _use_approx_recip(x2d.dtype)

    min_rows = R if R < sub else sub
    # Single pass whenever the minimum sublane-aligned row tile fits the
    # single-pass VMEM ceiling.  Two-pass moves 1.5x HBM bytes and burns an
    # extra full-tile exp (EUP pressure on v7x), so it is strictly a fallback.
    if min_rows * row_bytes_f32 <= _BUDGETS["single_pass_max"]:
        cand = min(_BUDGETS["work_budget"] // max(1, row_bytes_hbm),
                   _BUDGETS["single_pass_max"] // max(1, row_bytes_f32))
        tile_r = max(min_rows, min(R, cand))
        if tile_r < R:
            tile_r = _round_down_mult(tile_r, sub)
        # Guarantee >= 2 grid steps on the parallel axis so both v7x TensorCores
        # get work; an extra ~0.35us step is noise on single-TC chips.
        if tile_r >= R and R >= 2 * sub:
            tile_r = _round_down_mult(pl.cdiv(R, 2), sub)
        return _softmax_rows_single(x2d, tile_r, approx_recip)

    # Very long rows (huge 'CxHxW'): tile the reduce axis.
    tile_r = R if R < sub else min(_round_down_mult(R, sub), 8 * sub)
    tile_n = _BUDGETS["work_budget"] // (tile_r * 4)
    if tile_n >= N:
        tile_n = N
    else:
        tile_n = _round_down_mult(tile_n, 128)
    return _softmax_rows_two_pass(x2d, tile_r, tile_n, approx_recip)


def _softmax_channels_two_pass(x3d, approx_recip):
    """Large-C fallback: channel-tiled running max/sum, then normalize."""
    B, C, HW = x3d.shape
    tile_hw = HW if HW <= 128 else 128
    if C <= 8:
        tile_c = C
    else:
        tile_c = _round_down_mult(_BUDGETS["work_budget"] // (tile_hw * 4), 8)
        tile_c = min(tile_c, _round_down_mult(C, 8))
    nc = pl.cdiv(C, tile_c)
    nhw = pl.cdiv(HW, tile_hw)
    needs_mask = (C % tile_c) != 0

    stats_kernel = functools.partial(
        _softmax_channels_stats_kernel, tile_c=tile_c, c_total=C, needs_mask=needs_mask)

    m, s = pl.pallas_call(
        stats_kernel,
        out_shape=(jax.ShapeDtypeStruct((B, 1, HW), jnp.float32),
                   jax.ShapeDtypeStruct((B, 1, HW), jnp.float32)),
        grid_spec=pl.GridSpec(
            grid=(B, nhw, nc),
            in_specs=[pl.BlockSpec((1, tile_c, tile_hw), lambda b, j, k: (b, k, j))],
            out_specs=(pl.BlockSpec((1, 1, tile_hw), lambda b, j, k: (b, 0, j)),
                       pl.BlockSpec((1, 1, tile_hw), lambda b, j, k: (b, 0, j))),
        ),
        compiler_params=_compiler_params(("parallel", "parallel", "arbitrary")),
    )(x3d)

    norm_kernel = functools.partial(
        _softmax_channels_normalize_kernel, approx_recip=approx_recip)

    return pl.pallas_call(
        norm_kernel,
        out_shape=jax.ShapeDtypeStruct((B, C, HW), x3d.dtype),
        grid_spec=pl.GridSpec(
            grid=(B, nhw, nc),
            in_specs=[pl.BlockSpec((1, tile_c, tile_hw), lambda b, j, k: (b, k, j)),
                      pl.BlockSpec((1, 1, tile_hw), lambda b, j, k: (b, 0, j)),
                      pl.BlockSpec((1, 1, tile_hw), lambda b, j, k: (b, 0, j))],
            out_specs=pl.BlockSpec((1, tile_c, tile_hw), lambda b, j, k: (b, k, j)),
        ),
        compiler_params=_compiler_params(("parallel", "parallel", "parallel")),
    )(x3d, m, s)


def softmax_channels(x3d):
    """Softmax over axis=1 of a (B, C, HW) array; HW stays lane-dense."""
    B, C, HW = x3d.shape
    itemsize = jnp.dtype(x3d.dtype).itemsize
    approx_recip = _use_approx_recip(x3d.dtype)

    min_hw = HW if HW < 128 else 128
    # Guard: with tile_hw floored at 128 lanes the block is C*128*4 f32 bytes
    # regardless of budget; for huge C fall back to the channel-tiled two-pass.
    if C * min_hw * 4 > _BUDGETS["single_pass_max"]:
        return _softmax_channels_two_pass(x3d, approx_recip)

    cols_budget = _BUDGETS["work_budget"] // max(1, C * itemsize)
    cols_vmem = _BUDGETS["single_pass_max"] // max(1, C * 4)
    cols = max(min_hw, min(cols_budget, cols_vmem))
    if cols >= HW:
        tile_hw = HW
    else:
        tile_hw = _round_down_mult(cols, 128)

    # Small C*HW slabs: fold several batch elements per block to amortize the
    # ~0.35us/step pipeline overhead.
    tile_b = 1
    if tile_hw >= HW:
        slab_hbm = max(1, C * HW * itemsize)
        slab_f32 = max(1, C * HW * 4)
        tile_b = max(1, min(B,
                            _BUDGETS["work_budget"] // slab_hbm,
                            _BUDGETS["single_pass_max"] // slab_f32))

    # Guarantee >= 2 grid steps so both v7x TensorCores get work.
    if pl.cdiv(B, tile_b) * pl.cdiv(HW, tile_hw) == 1:
        if B >= 2:
            tile_b = pl.cdiv(B, 2)
        elif HW >= 256:
            tile_hw = _round_down_mult(pl.cdiv(HW, 2), 128)

    kernel = functools.partial(_softmax_channels_kernel, approx_recip=approx_recip)
    return pl.pallas_call(
        kernel,
        out_shape=jax.ShapeDtypeStruct((B, C, HW), x3d.dtype),
        grid_spec=pl.GridSpec(
            grid=(pl.cdiv(B, tile_b), pl.cdiv(HW, tile_hw)),
            in_specs=[pl.BlockSpec((tile_b, C, tile_hw), lambda b, j: (b, 0, j))],
            out_specs=pl.BlockSpec((tile_b, C, tile_hw), lambda b, j: (b, 0, j)),
        ),
        compiler_params=_compiler_params(("parallel", "parallel")),
    )(x3d)


# --------------------------------------------------------------------------
# Module
# --------------------------------------------------------------------------
class PallasSoftmax:
    """Softmax over channels ('C'), space ('HxW'), or both ('CxHxW')."""

    valid_dim = ['C', 'HxW', 'CxHxW']

    def __init__(self, dim):
        assert dim in self.valid_dim, (
            f'`dim` should be in {self.valid_dim}, received {dim}')
        self.dim = dim

    def __call__(self, x):
        # x: (B, C, H, W)  NCHW
        B, C, H, W = x.shape
        if self.dim == 'C':
            # No NCHW->NHWC transpose: reduce over the channel (sublane) axis,
            # keep H*W as the lane-dense last dim.
            y = softmax_channels(x.reshape(B, C, H * W))
            return y.reshape(B, C, H, W)
        elif self.dim == 'HxW':
            return softmax_rows(x.reshape(B * C, H * W)).reshape(B, C, H, W)
        else:  # 'CxHxW'
            return softmax_rows(x.reshape(B, C * H * W)).reshape(B, C, H, W)

    def __repr__(self):
        return f"{self.__class__.__name__}(dim='{self.dim}')"


def _reference(x, dim):
    B, C, H, W = x.shape
    xf = x.astype(jnp.float32)
    if dim == 'C':
        r = jax.nn.softmax(xf, axis=1)
    elif dim == 'HxW':
        r = jax.nn.softmax(xf.reshape(B, C, -1), axis=-1).reshape(x.shape)
    else:
        r = jax.nn.softmax(xf.reshape(B, -1), axis=-1).reshape(x.shape)
    return r.astype(x.dtype)


if __name__ == "__main__":
    key = jax.random.PRNGKey(0)
    x = jax.random.normal(key, (2, 4, 16, 16), dtype=jnp.float32)

    for dim in ['C', 'HxW', 'CxHxW']:
        mod = PallasSoftmax(dim)
        y = jax.block_until_ready(mod(x))
        y_ref = _reference(x, dim)
        assert y.shape == x.shape and y.dtype == x.dtype
        assert jnp.allclose(y, y_ref, atol=1e-5, rtol=1e-5), f"mismatch for dim={dim}"

    # Exercise the two-pass (long-row) path with deliberately small tiles:
    # ragged row count (20 % 8 != 0) and non-128-multiple reduce dim per tile.
    x2 = jax.random.normal(jax.random.PRNGKey(1), (20, 640), dtype=jnp.float32)
    y2 = jax.block_until_ready(
        _softmax_rows_two_pass(x2, tile_r=8, tile_n=256, approx_recip=False))
    y2_ref = jax.nn.softmax(x2, axis=-1)
    assert jnp.allclose(y2, y2_ref, atol=1e-5, rtol=1e-5), "row two-pass mismatch"

    # Exercise the large-C (channel-tiled) two-pass fallback path directly:
    # C=20 forces a ragged channel tile (mask path) at tile_c=16, tile_hw=128.
    x3 = jax.random.normal(jax.random.PRNGKey(2), (2, 20, 256), dtype=jnp.float32)
    y3 = jax.block_until_ready(_softmax_channels_two_pass(x3, approx_recip=False))
    y3_ref = jax.nn.softmax(x3, axis=1)
    assert jnp.allclose(y3, y3_ref, atol=1e-5, rtol=1e-5), "channel two-pass mismatch"

    # Exercise bf16 (dtype-aware sublane tiles + approx EUP reciprocal + split grid).
    x4 = jax.random.normal(jax.random.PRNGKey(3), (32, 384), dtype=jnp.float32)
    x4b = x4.astype(jnp.bfloat16)
    y4 = jax.block_until_ready(softmax_rows(x4b))
    y4_ref = jax.nn.softmax(x4b.astype(jnp.float32), axis=-1).astype(jnp.bfloat16)
    assert y4.dtype == jnp.bfloat16
    assert jnp.allclose(y4.astype(jnp.float32), y4_ref.astype(jnp.float32),
                        atol=1e-2, rtol=1e-2), "bf16 rows mismatch"

    print("KERNEL_OK")
</pallas_src>

<mosaic_0001>
module attributes {stable_mosaic.version = 11 : i64} {
  func.func @_softmax_channels_kernel(%arg0: i32, %arg1: i32, %arg2: memref<1x4x256xf32, #tpu.memory_space<vmem>>, %arg3: memref<1x4x256xf32, #tpu.memory_space<vmem>>) attributes {dimension_semantics = [#tpu.dimension_semantics<parallel>, #tpu.dimension_semantics<parallel>], iteration_bounds = array<i64: 2, 1>, scalar_prefetch = 0 : i64, scratch_operands = 0 : i64, tpu.core_type = #tpu.core_type<tc>, window_params = [{transform_indices = @transform_0, window_bounds = array<i64: 1, 4, 256>}, {transform_indices = @transform_1, window_bounds = array<i64: 1, 4, 256>}]} {
    %c0 = arith.constant 0 : index
    %c0_0 = arith.constant 0 : index
    %c0_1 = arith.constant 0 : index
    %0 = vector.load %arg2[%c0, %c0_0, %c0_1] : memref<1x4x256xf32, #tpu.memory_space<vmem>>, vector<1x4x256xf32>
    %cst = arith.constant dense<0xFF800000> : vector<1x256xf32>
    %1 = vector.multi_reduction <maximumf>, %0, %cst [1] : vector<1x4x256xf32> to vector<1x256xf32>
    %2 = vector.shape_cast %1 : vector<1x256xf32> to vector<1x1x256xf32>
    %3 = vector.broadcast %2 : vector<1x1x256xf32> to vector<1x4x256xf32>
    %4 = arith.subf %0, %3 : vector<1x4x256xf32>
    %5 = math.exp %4 : vector<1x4x256xf32>
    %cst_2 = arith.constant dense<0.000000e+00> : vector<1x256xf32>
    %6 = vector.multi_reduction <add>, %5, %cst_2 [1] : vector<1x4x256xf32> to vector<1x256xf32>
    %7 = vector.shape_cast %6 : vector<1x256xf32> to vector<1x1x256xf32>
    %8 = tpu.reciprocal %7 : vector<1x1x256xf32> -> vector<1x1x256xf32>
    %9 = vector.broadcast %8 : vector<1x1x256xf32> to vector<1x4x256xf32>
    %10 = arith.mulf %5, %9 : vector<1x4x256xf32>
    %c0_3 = arith.constant 0 : index
    %c0_4 = arith.constant 0 : index
    %c0_5 = arith.constant 0 : index
    %11 = vector.load %arg3[%c0_3, %c0_4, %c0_5] : memref<1x4x256xf32, #tpu.memory_space<vmem>>, vector<1x4x256xf32>
    tpu.vector_store %arg3[%c0_3, %c0_4, %c0_5], %10 {strides = array<i32>} : memref<1x4x256xf32, #tpu.memory_space<vmem>>, vector<1x4x256xf32>,
    return
  }
  func.func @transform_0(%arg0: i32, %arg1: i32) -> (i32, i32, i32) {
    %c0_i32 = arith.constant 0 : i32
    %c0_i32_0 = arith.constant 0 : i32
    return %arg0, %c0_i32, %arg1 : i32, i32, i32
  }
  func.func @transform_1(%arg0: i32, %arg1: i32) -> (i32, i32, i32) {
    %c0_i32 = arith.constant 0 : i32
    %c0_i32_0 = arith.constant 0 : i32
    return %arg0, %c0_i32, %arg1 : i32, i32, i32
  }
}

</mosaic_0001>

<llo_original>
// kernel: tpu_custom_call.1
$region0: #{tpu_custom_call.1}
  #allocation0 [shape = 'u32[]', space=smem, size = 0x4, offset = 0x4, fixed_abs, tag = 'smem constant byte address 0x4 - core index']
  #allocation1 [shape = 'u32[144,128]{1,0:T(1,128)}', space=vmem, size = 0x12000, scoped, tag = 'internal scratch']
  %s0 = inlined_call_operand.hbm [shape: f32[2,4,256], index: 0, kind: input, shape index: {}]
  %s1 = inlined_call_operand.hbm [shape: f32[2,4,256], index: 1, kind: output, shape index: {}]
  %s2 = sld [smem:[#allocation0]]
  $region41: #{tpu_custom_call.1} parent=0
    _
  %s4 = ssub.s32 1, %s2
  %s5 = scalar_select 0, %s4, %s2
  $region1: #{tpu_custom_call.1} parent=0
    #allocation2 [shape = 'u8[8192]{0}', space=vmem, size = 0x2000, scoped, tag = 'input window, operand 0']
    #allocation3 [shape = 's32[2]{0}', space=sflag, size = 0x8, scoped, tag = 'scoped memory for tpu_custom_call.1']
    #allocation4 [shape = 's32[2]{0}', space=sflag, size = 0x8, scoped, tag = 'scoped memory for tpu_custom_call.1']
    #allocation5 [shape = 'u8[8192]{0}', space=vmem, size = 0x2000, scoped, tag = 'output window, operand 0']
    %6 = vsyncpa [#allocation3], 0
    %s7 = scalar_lea.sflag [#allocation3], 1
    %8 = vsyncpa %s7, 0
    %9 = vsyncpa [#allocation4], 0
    %s10 = scalar_lea.sflag [#allocation4], 1
    %11 = vsyncpa %s10, 0
    loop: start=0, step=1, limit=4
    $region2: #{tpu_custom_call.1} parent=1 // loop_pre_header
      _
    $region3: #{tpu_custom_call.1} parent=1 // loop_header
      %s13 = sphi 0, %s17
      %p14 = scmp.ge.s32.totalorder %s13, 4
      %s20 = sphi 0, %s32
      %s21 = sphi 0, %s28
      %s22 = sphi 0, %s20
      %s23 = sphi 0, %s21
      %s24 = sphi 0, %s22
      %s25 = sphi 0, %s23
      %s37 = sphi 0, %s39
      %s40 = sphi 0, %s37
      %s41 = sphi 0, %s40
      %s57 = sphi 0, %s41
      %s65 = sphi 0, %s67
      %s68 = sphi 0, %s65
      %s69 = sphi 0, %s68
      %s85 = sphi 0, %s69
    $region4: #{tpu_custom_call.1} parent=1 // loop_header_branch
      %16 = sbr.rel (%p14) target = $region8
    $region5: #{tpu_custom_call.1} parent=1 // loop_body
      %s18 = ssub.s32 %s13, 1
      %s19 = ssub.s32 %s13, 2
      %s26 = sadd.s32 1, %s21
      %p27 = scmp.ge.s32.totalorder %s26, 1
      %s28 = scalar_select %p27, 0, %s26
      %s29 = sadd.s32 1, %s20
      %s30 = scalar_select %p27, %s29, %s20
      %p31 = scmp.ge.s32.totalorder %s30, 2
      %s32 = scalar_select %p31, 0, %s30
      %s33 = ssub.s32 %s20, %s32
      %s34 = ssub.s32 %s21, %s28
      %s35 = sor.u32 %s33, %s34
      %p36 = scmp.eq.s32.totalorder %s35, 0
      %s38 = sadd.s32 %s37, 1
      %s39 = scalar_select %p36, %s37, %s38
      %p42 = pneg %p36
      %p43 = scmp.eq.s32.totalorder %s13, 1
      %p44 = por %p42, %p43
      %p45 = scmp.ne.s32.totalorder %s37, %s40
      %p46 = scmp.eq.s32.totalorder %s13, 0
      %p47 = por %p45, %p46
      %p48 = scmp.ne.s32.totalorder %s37, %s40
      %p49 = scmp.eq.s32.totalorder %s18, 1
      %p50 = por %p48, %p49
      %p51 = scmp.ne.s32.totalorder %s40, %s41
      %p52 = scmp.eq.s32.totalorder %s18, 0
      %p53 = por %p51, %p52
      %p54 = scmp.ne.s32.totalorder %s40, %s41
      %p55 = scmp.eq.s32.totalorder %s19, 1
      %p56 = por %p54, %p55
      %p58 = scmp.ne.s32.totalorder %s41, %s57
      %p59 = scmp.eq.s32.totalorder %s19, 0
      %p60 = por %p58, %p59
      %s61 = ssub.s32 %s20, %s32
      %s62 = ssub.s32 %s21, %s28
      %s63 = sor.u32 %s61, %s62
      %p64 = scmp.eq.s32.totalorder %s63, 0
      %s66 = sadd.s32 %s65, 1
      %s67 = scalar_select %p64, %s65, %s66
      %p70 = pneg %p64
      %p71 = scmp.eq.s32.totalorder %s13, 1
      %p72 = por %p70, %p71
      %p73 = scmp.ne.s32.totalorder %s65, %s68
      %p74 = scmp.eq.s32.totalorder %s13, 0
      %p75 = por %p73, %p74
      %p76 = scmp.ne.s32.totalorder %s65, %s68
      %p77 = scmp.eq.s32.totalorder %s18, 1
      %p78 = por %p76, %p77
      %p79 = scmp.ne.s32.totalorder %s68, %s69
      %p80 = scmp.eq.s32.totalorder %s18, 0
      %p81 = por %p79, %p80
      %p82 = scmp.ne.s32.totalorder %s68, %s69
      %p83 = scmp.eq.s32.totalorder %s19, 1
      %p84 = por %p82, %p83
      %p86 = scmp.ne.s32.totalorder %s69, %s85
      %p87 = scmp.eq.s32.totalorder %s19, 0
      %p88 = por %p86, %p87
      %p89 = scmp.le.s32.totalorder 1, %s13
      %p90 = scmp.lt.s32.totalorder %s13, 3
      %p91 = pnand %p89, %p90
      %p92 = pneg %p91
      // Predicated region
      $region9: #{tpu_custom_call.1} parent=5 // pred_check
        _
      $region10: #{tpu_custom_call.1} parent=5 // pred_check_branch
        %94 = sbr.rel (%p91) target = $region12
      $region11: #{tpu_custom_call.1} parent=5 // pred_region
        %s95 = ssub.s32 %s13, 1
      $region12: #{tpu_custom_call.1} parent=5 // pred_fallthru
        _
      %p96 = scmp.lt.s32.totalorder %s13, 2
      // Predicated region
      $region13: #{tpu_custom_call.1} parent=5 // pred_check
        %p97 = pneg %p96
      $region14: #{tpu_custom_call.1} parent=5 // pred_check_branch
        %99 = sbr.rel (%p97) target = $region16
      $region15: #{tpu_custom_call.1} parent=5 // pred_region
        // Predicated region
        $region17: #{tpu_custom_call.1} parent=15 // pred_check
          %p100 = pneg %p47
        $region18: #{tpu_custom_call.1} parent=15 // pred_check_branch
          %102 = sbr.rel (%p100) target = $region20
        $region19: #{tpu_custom_call.1} parent=15 // pred_region
          %s103 = sand.u32 %s37, 1
          %s104 = scalar_lea.sflag [#allocation3], %s103
          %s105 = sand.u32 %s37, 1
          %s106 = smul.addr %s105, 8
          %s107 = scalar_lea.vmem [#allocation2], %s106
          %s108 = smul.u32 2, %s21
          %s110 = ssub.s32 128, 128
          %111 = vsyncadd %s104, %s110
          %s112 = smul.addr %s20, 2
          %s113 = sadd.s32 %s108, %s112
          %s114 = smul.addr %s113, 64
          %s115 = scalar_lea.hbm %s0, %s114
          %s117 = sshll.u32 %s107, 4
          %s118 = int_to_ptr.vmem [resolvable:$true] %s117
          %120 = dma.hbm_to_vmem [thread:$0]  %s115, 128, %s118, %s104
        $region20: #{tpu_custom_call.1} parent=15 // pred_fallthru
          _
      $region16: #{tpu_custom_call.1} parent=5 // pred_fallthru
        _
      %p121 = scmp.le.s32.totalorder 1, %s13
      %p122 = scmp.lt.s32.totalorder %s13, 3
      %p123 = pnand %p121, %p122
      %p124 = pneg %p123
      // Predicated region
      $region21: #{tpu_custom_call.1} parent=5 // pred_check
        _
      $region22: #{tpu_custom_call.1} parent=5 // pred_check_branch
        %126 = sbr.rel (%p123) target = $region24
      $region23: #{tpu_custom_call.1} parent=5 // pred_region
        %s127 = ssub.s32 %s13, 1
        %s128 = sand.u32 %s40, 1
        %s129 = scalar_lea.sflag [#allocation3], %s128
        %s130 = sand.u32 %s40, 1
        %s131 = smul.addr %s130, 8
        %s132 = scalar_lea.vmem [#allocation2], %s131
        // Predicated region
        $region25: #{tpu_custom_call.1} parent=23 // pred_check
          %p133 = pneg %p53
        $region26: #{tpu_custom_call.1} parent=23 // pred_check_branch
          %135 = sbr.rel (%p133) target = $region28
        $region27: #{tpu_custom_call.1} parent=23 // pred_region
          %136 = dma.done %s129, 128
        $region28: #{tpu_custom_call.1} parent=23 // pred_fallthru
          _
        %s137 = sand.u32 %s40, 1
        %s138 = scalar_lea.sflag [#allocation3], %s137
        %s139 = sand.u32 %s40, 1
        %s140 = smul.addr %s139, 8
        %s141 = scalar_lea.vmem [#allocation2], %s140
        %p142 = pneg %p53
        %p143 = pneg %p50
        %p144 = pneg %p81
        %p145 = pneg %p78
        %s146 = sand.u32 %s68, 1
        %s147 = scalar_lea.sflag [#allocation4], %s146
        %s148 = sand.u32 %s68, 1
        %s149 = smul.addr %s148, 8
        %s150 = scalar_lea.vmem [#allocation5], %s149
        %s151 = smul.u32 2, %s23
        %s152 = smul.u32 2, %s23
        %v153 = vld [vmem:[%s132] sm:$0xff]
        %v155 = vcombine.high %v153, %v153
        %vm157 = vcmask 1043456
        %v158 = vsel %vm157, %v153, -inf
        %v159 = vrot.slane %v158, 4
        %v160 = vmax.f32 %v158, %v159
        %v161 = vrot.slane %v160, 2
        %v162 = vmax.f32 %v160, %v161
        %v163 = vrot.slane %v162, 1
        %v164 = vmax.f32 %v162, %v163
        %v165 = vsel %vm157, %v155, -inf
        %v166 = vrot.slane %v165, 4
        %v167 = vmax.f32 %v165, %v166
        %v168 = vrot.slane %v167, 2
        %v169 = vmax.f32 %v167, %v168
        %v170 = vrot.slane %v169, 1
        %v171 = vmax.f32 %v169, %v170
        %v174 = vcombine.low %v164, %v171
        %v176 = vsub.f32 %v153, %v174
        %v177 = vmul.f32 %v176, 1.442695
        %v178 = vpow.pop %v177
        %v180 = vcombine.high %v178, %v178
        %v182 = vsel %vm157, %v178, 0.0
        %v183 = vrot.slane %v182, 4
        %v184 = vadd.f32 %v182, %v183
        %v185 = vrot.slane %v184, 2
        %v186 = vadd.f32 %v184, %v185
        %v187 = vrot.slane %v186, 1
        %v188 = vadd.f32 %v186, %v187
        %v189 = vsel %vm157, %v180, 0.0
        %v190 = vrot.slane %v189, 4
        %v191 = vadd.f32 %v189, %v190
        %v192 = vrot.slane %v191, 2
        %v193 = vadd.f32 %v191, %v192
        %v194 = vrot.slane %v193, 1
        %v195 = vadd.f32 %v193, %v194
        %v196 = vrcp.pop %v188
        %v197 = vrcp.pop %v195
        %v200 = vcombine.low %v196, %v197
        %v202 = vmul.f32 %v178, %v200
        %203 = vst [vmem:[%s150] sm:$0xff] %v202
        %s204 = sand.u32 %s68, 1
        %s205 = scalar_lea.sflag [#allocation4], %s204
        %s206 = sand.u32 %s68, 1
        %s207 = smul.addr %s206, 8
        %s208 = scalar_lea.vmem [#allocation5], %s207
        // Predicated region
        $region29: #{tpu_custom_call.1} parent=23 // pred_check
          %p209 = pneg %p78
        $region30: #{tpu_custom_call.1} parent=23 // pred_check_branch
          %211 = sbr.rel (%p209) target = $region32
        $region31: #{tpu_custom_call.1} parent=23 // pred_region
          %s212 = smul.u32 2, %s23
          %s214 = ssub.s32 128, 128
          %215 = vsyncadd %s205, %s214
          %s216 = smul.addr %s22, 2
          %s217 = sadd.s32 %s212, %s216
          %s218 = smul.addr %s217, 64
          %s219 = scalar_lea.hbm %s1, %s218
          %s221 = sshll.u32 %s208, 4
          %s222 = int_to_ptr.vmem [resolvable:$true] %s221
          %224 = dma.vmem_to_hbm [thread:$0]  %s222, 128, %s219, %s205
        $region32: #{tpu_custom_call.1} parent=23 // pred_fallthru
          _
      $region24: #{tpu_custom_call.1} parent=5 // pred_fallthru
        _
      %p225 = scmp.le.s32.totalorder 2, %s13
      // Predicated region
      $region33: #{tpu_custom_call.1} parent=5 // pred_check
        %p226 = pneg %p225
      $region34: #{tpu_custom_call.1} parent=5 // pred_check_branch
        %228 = sbr.rel (%p226) target = $region36
      $region35: #{tpu_custom_call.1} parent=5 // pred_region
        %s229 = ssub.s32 %s13, 2
        // Predicated region
        $region37: #{tpu_custom_call.1} parent=35 // pred_check
          %p230 = pneg %p84
        $region38: #{tpu_custom_call.1} parent=35 // pred_check_branch
          %232 = sbr.rel (%p230) target = $region40
        $region39: #{tpu_custom_call.1} parent=35 // pred_region
          %s233 = sand.u32 %s69, 1
          %s234 = scalar_lea.sflag [#allocation4], %s233
          %s235 = sand.u32 %s69, 1
          %s236 = smul.addr %s235, 8
          %s237 = scalar_lea.vmem [#allocation5], %s236
          %238 = dma.done %s234, 128
        $region40: #{tpu_custom_call.1} parent=35 // pred_fallthru
          _
      $region36: #{tpu_custom_call.1} parent=5 // pred_fallthru
        _
    $region6: #{tpu_custom_call.1} parent=1 // loop_footer
      %s17 = sadd.s32 1, %s13
    $region7: #{tpu_custom_call.1} parent=1 // loop_footer_branch
      %12 = sbr.rel target = $region3
    $region8: #{tpu_custom_call.1} parent=1 // loop_exit
      _
    %239 = vsyncpa [#allocation3], 1
    %s240 = scalar_lea.sflag [#allocation3], 1
    %241 = vsyncpa %s240, 1
    %242 = vsyncpa [#allocation4], 1
    %s243 = scalar_lea.sflag [#allocation4], 1
    %244 = vsyncpa %s243, 1

</llo_original>
